<compile_context>
chip_gen: v5e
topology: v5e:2x2
jax: 0.10.0
libtpu: 0.0.40
codegen_flags: <defaults>
</compile_context>

<pallas_src>
import functools

import jax
import jax.numpy as jnp
from jax.experimental import pallas as pl
from jax.experimental.pallas import tpu as pltpu

HIDDEN = 256


def critic_kernel(sa_ref, wsa_ref, b12_ref,
                  w2a_ref, w3_ref, b3_ref,
                  w4_ref, b4_ref,
                  out_ref):
    # Fused layer-1 + action-half of layer-2 (single small-K MXU pass):
    #   [state | action] @ [[W1, 0], [0, W2b]] + [b1 | b2]
    h = jnp.dot(sa_ref[...], wsa_ref[...], preferred_element_type=jnp.float32)
    h = h + b12_ref[...]                                       # f32 bias add
    h1 = jnp.maximum(h[:, :HIDDEN], 0.0).astype(jnp.bfloat16)  # relu(state@W1 + b1)
    pre2 = h[:, HIDDEN:]                                       # action@W2b + b2 (f32)

    # l2: relu(h1 @ W2a + action @ W2b + b2)
    h2 = jnp.dot(h1, w2a_ref[...], preferred_element_type=jnp.float32) + pre2
    h2 = jnp.maximum(h2, 0.0).astype(jnp.bfloat16)

    # l3: relu(h2 @ W3 + b3)   (kept in f32 for the final layer)
    h3 = jnp.dot(h2, w3_ref[...], preferred_element_type=jnp.float32) + b3_ref[...]
    h3 = jnp.maximum(h3, 0.0)

    # l4 (out_features == 1): VPU multiply + cross-lane reduce instead of a
    # 1-column MXU matmul.
    out_ref[...] = (jnp.sum(h3 * w4_ref[...], axis=-1, keepdims=True)
                    + b4_ref[...])


def _round_up(x, m):
    return ((x + m - 1) // m) * m


@functools.partial(jax.jit, static_argnames=("tb",))
def critic_forward(state, action, params, *, tb=512):
    """Pallas forward.  state: (B, state_dim) f32, action: (B, action_dim) f32 -> (B, 1) f32."""
    B, state_dim = state.shape
    action_dim = action.shape[1]
    K = state_dim + action_dim

    # ---- batch tiling -------------------------------------------------------
    # 16-row alignment for bf16 sublane packing.  Multi-step grids use tiles
    # that are multiples of 128; grids get >=2 steps once the batch is large
    # enough so v7x's second TensorCore participates.
    b16 = _round_up(B, 16)
    tile_cap = min(max(_round_up(tb, 128), 128), 1024)   # cap keeps per-step VMEM small (v5e-safe)
    if b16 <= 256:
        tile = b16                                        # tiny batch: single step is cheapest
    else:
        tile = min(tile_cap, _round_up((b16 + 1) // 2, 128))
    b_pad = _round_up(b16, tile)

    if b_pad != B:
        state = jnp.pad(state, ((0, b_pad - B), (0, 0)))
        action = jnp.pad(action, ((0, b_pad - B), (0, 0)))

    # ---- operand prep -------------------------------------------------------
    # Concat-free W2 split (W2a for the hidden part, W2b for the action part);
    # fuse the two tiny-K first-layer matmuls into one block-diagonal RHS.
    sa = jnp.concatenate([state, action], axis=1).astype(jnp.bfloat16)   # (b_pad, K)
    wsa = jnp.zeros((K, 2 * HIDDEN), jnp.float32)
    wsa = wsa.at[:state_dim, :HIDDEN].set(params["w1"])
    wsa = wsa.at[state_dim:, HIDDEN:].set(params["w2b"])
    wsa = wsa.astype(jnp.bfloat16)
    b12 = jnp.concatenate([params["b1"], params["b2"]], axis=1)          # (1, 512) f32

    w2a = params["w2a"].astype(jnp.bfloat16)
    w3 = params["w3"].astype(jnp.bfloat16)
    b3 = params["b3"]
    w4_row = params["w4"].reshape(1, HIDDEN).astype(jnp.float32)         # (1, 256)
    b4 = params["b4"].reshape(1, 1).astype(jnp.float32)

    grid = (b_pad // tile,)
    const = lambda i: (0, 0)            # weights: same block every step (stay VMEM-resident)
    batched = lambda i: (i, 0)          # activations / output: tile over batch rows

    flops = 2 * b_pad * (K * 2 * HIDDEN + 2 * HIDDEN * HIDDEN + HIDDEN)
    bytes_accessed = (sa.size * 2 + wsa.size * 2 + w2a.size * 2 + w3.size * 2
                      + (b12.size + b3.size + w4_row.size + b4.size) * 4
                      + b_pad * 4)

    # TODO(synk): callers running SAC twin critics (Q1/Q2 or target nets) should
    # stack both weight sets into one pallas_call to halve launch overhead.
    out = pl.pallas_call(
        critic_kernel,
        out_shape=jax.ShapeDtypeStruct((b_pad, 1), jnp.float32),
        grid=grid,
        in_specs=[
            pl.BlockSpec((tile, K), batched),             # [state | action]  (bf16)
            pl.BlockSpec((K, 2 * HIDDEN), const),         # block-diag [W1 | W2b] (bf16)
            pl.BlockSpec((1, 2 * HIDDEN), const),         # [b1 | b2]  (f32)
            pl.BlockSpec((HIDDEN, HIDDEN), const),        # W2a (bf16)
            pl.BlockSpec((HIDDEN, HIDDEN), const),        # W3  (bf16)
            pl.BlockSpec((1, HIDDEN), const),             # b3  (f32)
            pl.BlockSpec((1, HIDDEN), const),             # w4 row (f32)
            pl.BlockSpec((1, 1), const),                  # b4  (f32)
        ],
        out_specs=pl.BlockSpec((tile, 1), batched),
        compiler_params=pltpu.CompilerParams(
            dimension_semantics=("parallel",),            # megacore / 2-TC split on v7x
            vmem_limit_bytes=32 * 1024 * 1024,            # explicit headroom (v5e default is 16 MiB)
        ),
        cost_estimate=pl.CostEstimate(
            flops=flops, transcendentals=0, bytes_accessed=bytes_accessed),
    )(sa, wsa, b12, w2a, w3, b3, w4_row, b4)

    return out[:B]


def init_params(key, state_dim, action_dim):
    # PyTorch-Linear-style uniform init; weights stored as (in, out).
    def linear(key, fan_in, fan_out):
        kw, kb = jax.random.split(key)
        bound = 1.0 / jnp.sqrt(fan_in)
        w = jax.random.uniform(kw, (fan_in, fan_out), jnp.float32, -bound, bound)
        b = jax.random.uniform(kb, (1, fan_out), jnp.float32, -bound, bound)
        return w, b

    k1, k2, k3, k4 = jax.random.split(key, 4)
    w1, b1 = linear(k1, state_dim, HIDDEN)
    w2, b2 = linear(k2, HIDDEN + action_dim, HIDDEN)
    w3, b3 = linear(k3, HIDDEN, HIDDEN)
    w4, b4 = linear(k4, HIDDEN, 1)
    return {
        "w1": w1, "b1": b1,
        # split W2 so that cat([q1, action]) @ W2 = q1 @ w2a + action @ w2b
        "w2a": w2[:HIDDEN, :], "w2b": w2[HIDDEN:, :], "b2": b2,
        "w3": w3, "b3": b3,
        "w4": w4, "b4": b4,
    }


def critic_reference(state, action, params):
    """Pure-JAX reference mirroring the kernel numerics (bf16 matmul inputs, f32 accum)."""
    def dot(x, w):
        return jnp.dot(x.astype(jnp.bfloat16), w.astype(jnp.bfloat16),
                       preferred_element_type=jnp.float32)

    h1 = jax.nn.relu(dot(state, params["w1"]) + params["b1"])
    h2 = jax.nn.relu(dot(h1, params["w2a"]) + dot(action, params["w2b"])
                     + params["b2"])
    h3 = jax.nn.relu(dot(h2, params["w3"]) + params["b3"])
    return h3 @ params["w4"].astype(jnp.float32) + params["b4"]


if __name__ == "__main__":
    batch, state_dim, action_dim = 64, 17, 6

    key = jax.random.PRNGKey(0)
    kp, ks, ka = jax.random.split(key, 3)
    params = init_params(kp, state_dim, action_dim)
    state = jax.random.normal(ks, (batch, state_dim), jnp.float32)
    action = jax.random.normal(ka, (batch, action_dim), jnp.float32)

    q = critic_forward(state, action, params)
    q = jax.block_until_ready(q)

    q_ref = critic_reference(state, action, params)
    assert q.shape == (batch, 1)
    assert jnp.allclose(q, q_ref, atol=5e-3, rtol=5e-3), \
        float(jnp.max(jnp.abs(q - q_ref)))

    print("KERNEL_OK")
</pallas_src>

<mosaic_0001>
module attributes {stable_mosaic.version = 11 : i64} {
  func.func @critic_kernel(%arg0: i32, %arg1: memref<64x23xbf16, #tpu.memory_space<vmem>>, %arg2: memref<23x512xbf16, #tpu.memory_space<vmem>>, %arg3: memref<1x512xf32, #tpu.memory_space<vmem>>, %arg4: memref<256x256xbf16, #tpu.memory_space<vmem>>, %arg5: memref<256x256xbf16, #tpu.memory_space<vmem>>, %arg6: memref<1x256xf32, #tpu.memory_space<vmem>>, %arg7: memref<1x256xf32, #tpu.memory_space<vmem>>, %arg8: memref<1x1xf32, #tpu.memory_space<vmem>>, %arg9: memref<64x1xf32, #tpu.memory_space<vmem>>) attributes {dimension_semantics = [#tpu.dimension_semantics<parallel>], iteration_bounds = array<i64: 1>, scalar_prefetch = 0 : i64, scratch_operands = 0 : i64, tpu.core_type = #tpu.core_type<tc>, window_params = [{transform_indices = @transform_0, window_bounds = array<i64: 64, 23>}, {pipeline_mode = #tpu.pipeline_mode<synchronous>, transform_indices = @transform_1, window_bounds = array<i64: 23, 512>}, {pipeline_mode = #tpu.pipeline_mode<synchronous>, transform_indices = @transform_2, window_bounds = array<i64: 1, 512>}, {pipeline_mode = #tpu.pipeline_mode<synchronous>, transform_indices = @transform_3, window_bounds = array<i64: 256, 256>}, {pipeline_mode = #tpu.pipeline_mode<synchronous>, transform_indices = @transform_4, window_bounds = array<i64: 256, 256>}, {pipeline_mode = #tpu.pipeline_mode<synchronous>, transform_indices = @transform_5, window_bounds = array<i64: 1, 256>}, {pipeline_mode = #tpu.pipeline_mode<synchronous>, transform_indices = @transform_6, window_bounds = array<i64: 1, 256>}, {pipeline_mode = #tpu.pipeline_mode<synchronous>, transform_indices = @transform_7, window_bounds = array<i64: 1, 1>}, {transform_indices = @transform_8, window_bounds = array<i64: 64, 1>}]} {
    %c0 = arith.constant 0 : index
    %c0_0 = arith.constant 0 : index
    %0 = vector.load %arg1[%c0, %c0_0] : memref<64x23xbf16, #tpu.memory_space<vmem>>, vector<64x23xbf16>
    %c0_1 = arith.constant 0 : index
    %c0_2 = arith.constant 0 : index
    %1 = vector.load %arg2[%c0_1, %c0_2] : memref<23x512xbf16, #tpu.memory_space<vmem>>, vector<23x512xbf16>
    %cst = arith.constant dense<0.000000e+00> : vector<64x512xf32>
    %2 = tpu.matmul %0, %1, %cst {dimension_numbers = #tpu.dot_dimension_numbers<[1], [0], [0], [1], [0, 0, 1, 1], [], []>} : vector<64x23xbf16>, vector<23x512xbf16>, vector<64x512xf32> -> vector<64x512xf32>
    %c0_3 = arith.constant 0 : index
    %c0_4 = arith.constant 0 : index
    %3 = vector.load %arg3[%c0_3, %c0_4] : memref<1x512xf32, #tpu.memory_space<vmem>>, vector<1x512xf32>
    %4 = vector.broadcast %3 : vector<1x512xf32> to vector<64x512xf32>
    %5 = arith.addf %2, %4 : vector<64x512xf32>
    %6 = vector.extract_strided_slice %5 {offsets = [0, 0], sizes = [64, 256], strides = [1, 1]} : vector<64x512xf32> to vector<64x256xf32>
    %cst_5 = arith.constant 0.000000e+00 : f32
    %7 = vector.broadcast %cst_5 : f32 to vector<64x256xf32>
    %8 = arith.maximumf %6, %7 : vector<64x256xf32>
    %9 = arith.truncf %8 : vector<64x256xf32> to vector<64x256xbf16>
    %10 = vector.extract_strided_slice %5 {offsets = [0, 256], sizes = [64, 256], strides = [1, 1]} : vector<64x512xf32> to vector<64x256xf32>
    %c0_6 = arith.constant 0 : index
    %c0_7 = arith.constant 0 : index
    %11 = vector.load %arg4[%c0_6, %c0_7] : memref<256x256xbf16, #tpu.memory_space<vmem>>, vector<256x256xbf16>
    %cst_8 = arith.constant dense<0.000000e+00> : vector<64x256xf32>
    %12 = tpu.matmul %9, %11, %cst_8 {dimension_numbers = #tpu.dot_dimension_numbers<[1], [0], [0], [1], [0, 0, 1, 1], [], []>} : vector<64x256xbf16>, vector<256x256xbf16>, vector<64x256xf32> -> vector<64x256xf32>
    %13 = arith.addf %12, %10 : vector<64x256xf32>
    %cst_9 = arith.constant 0.000000e+00 : f32
    %14 = vector.broadcast %cst_9 : f32 to vector<64x256xf32>
    %15 = arith.maximumf %13, %14 : vector<64x256xf32>
    %16 = arith.truncf %15 : vector<64x256xf32> to vector<64x256xbf16>
    %c0_10 = arith.constant 0 : index
    %c0_11 = arith.constant 0 : index
    %17 = vector.load %arg5[%c0_10, %c0_11] : memref<256x256xbf16, #tpu.memory_space<vmem>>, vector<256x256xbf16>
    %cst_12 = arith.constant dense<0.000000e+00> : vector<64x256xf32>
    %18 = tpu.matmul %16, %17, %cst_12 {dimension_numbers = #tpu.dot_dimension_numbers<[1], [0], [0], [1], [0, 0, 1, 1], [], []>} : vector<64x256xbf16>, vector<256x256xbf16>, vector<64x256xf32> -> vector<64x256xf32>
    %c0_13 = arith.constant 0 : index
    %c0_14 = arith.constant 0 : index
    %19 = vector.load %arg6[%c0_13, %c0_14] : memref<1x256xf32, #tpu.memory_space<vmem>>, vector<1x256xf32>
    %20 = vector.broadcast %19 : vector<1x256xf32> to vector<64x256xf32>
    %21 = arith.addf %18, %20 : vector<64x256xf32>
    %cst_15 = arith.constant 0.000000e+00 : f32
    %22 = vector.broadcast %cst_15 : f32 to vector<64x256xf32>
    %23 = arith.maximumf %21, %22 : vector<64x256xf32>
    %c0_16 = arith.constant 0 : index
    %c0_17 = arith.constant 0 : index
    %24 = vector.load %arg7[%c0_16, %c0_17] : memref<1x256xf32, #tpu.memory_space<vmem>>, vector<1x256xf32>
    %25 = vector.broadcast %24 : vector<1x256xf32> to vector<64x256xf32>
    %26 = arith.mulf %23, %25 : vector<64x256xf32>
    %cst_18 = arith.constant dense<0.000000e+00> : vector<64xf32>
    %27 = vector.multi_reduction <add>, %26, %cst_18 [1] : vector<64x256xf32> to vector<64xf32>
    %28 = vector.shape_cast %27 : vector<64xf32> to vector<64x1xf32>
    %c0_19 = arith.constant 0 : index
    %c0_20 = arith.constant 0 : index
    %29 = vector.load %arg8[%c0_19, %c0_20] : memref<1x1xf32, #tpu.memory_space<vmem>>, vector<1x1xf32>
    %30 = vector.broadcast %29 : vector<1x1xf32> to vector<64x1xf32>
    %31 = arith.addf %28, %30 : vector<64x1xf32>
    %c0_21 = arith.constant 0 : index
    %c0_22 = arith.constant 0 : index
    %32 = vector.load %arg9[%c0_21, %c0_22] : memref<64x1xf32, #tpu.memory_space<vmem>>, vector<64x1xf32>
    tpu.vector_store %arg9[%c0_21, %c0_22], %31 {strides = array<i32>} : memref<64x1xf32, #tpu.memory_space<vmem>>, vector<64x1xf32>,
    return
  }
  func.func @transform_0(%arg0: i32) -> (i32, i32) {
    %c0_i32 = arith.constant 0 : i32
    %c0_i32_0 = arith.constant 0 : i32
    return %arg0, %c0_i32 : i32, i32
  }
  func.func @transform_1(%arg0: i32) -> (i32, i32) {
    %c0_i32 = arith.constant 0 : i32
    %c0_i32_0 = arith.constant 0 : i32
    %c0_i32_1 = arith.constant 0 : i32
    return %c0_i32, %c0_i32_0 : i32, i32
  }
  func.func @transform_2(%arg0: i32) -> (i32, i32) {
    %c0_i32 = arith.constant 0 : i32
    %c0_i32_0 = arith.constant 0 : i32
    %c0_i32_1 = arith.constant 0 : i32
    return %c0_i32, %c0_i32_0 : i32, i32
  }
  func.func @transform_3(%arg0: i32) -> (i32, i32) {
    %c0_i32 = arith.constant 0 : i32
    %c0_i32_0 = arith.constant 0 : i32
    %c0_i32_1 = arith.constant 0 : i32
    return %c0_i32, %c0_i32_0 : i32, i32
  }
  func.func @transform_4(%arg0: i32) -> (i32, i32) {
    %c0_i32 = arith.constant 0 : i32
    %c0_i32_0 = arith.constant 0 : i32
    %c0_i32_1 = arith.constant 0 : i32
    return %c0_i32, %c0_i32_0 : i32, i32
  }
  func.func @transform_5(%arg0: i32) -> (i32, i32) {
    %c0_i32 = arith.constant 0 : i32
    %c0_i32_0 = arith.constant 0 : i32
    %c0_i32_1 = arith.constant 0 : i32
    return %c0_i32, %c0_i32_0 : i32, i32
  }
  func.func @transform_6(%arg0: i32) -> (i32, i32) {
    %c0_i32 = arith.constant 0 : i32
    %c0_i32_0 = arith.constant 0 : i32
    %c0_i32_1 = arith.constant 0 : i32
    return %c0_i32, %c0_i32_0 : i32, i32
  }
  func.func @transform_7(%arg0: i32) -> (i32, i32) {
    %c0_i32 = arith.constant 0 : i32
    %c0_i32_0 = arith.constant 0 : i32
    %c0_i32_1 = arith.constant 0 : i32
    return %c0_i32, %c0_i32_0 : i32, i32
  }
  func.func @transform_8(%arg0: i32) -> (i32, i32) {
    %c0_i32 = arith.constant 0 : i32
    %c0_i32_0 = arith.constant 0 : i32
    return %arg0, %c0_i32 : i32, i32
  }
}

</mosaic_0001>

<llo_original>
// kernel: critic_forward.1
$region0: #{critic_forward.1}
  #allocation0 [shape = 'u32[]', space=smem, size = 0x4, offset = 0x4, fixed_abs, tag = 'smem constant byte address 0x4 - core index']
  #allocation1 [shape = 'u32[72,128]{1,0:T(1,128)}', space=vmem, size = 0x9000, scoped, tag = 'internal scratch']
  #allocation2 [shape = 'f32[1,1]{1,0:T(1,128)S(1)}', space=vmem, size = 0x200, scoped, tag = 'scoped memory for critic_forward.1']
  %s0 = inlined_call_operand.vmem [shape: bf16[64,23], index: 0, kind: input, shape index: {}]
  %s1 = inlined_call_operand.vmem [shape: bf16[23,512], index: 1, kind: input, shape index: {}]
  %s2 = inlined_call_operand.vmem [shape: f32[1,512], index: 2, kind: input, shape index: {}]
  %s3 = inlined_call_operand.vmem [shape: bf16[256,256], index: 3, kind: input, shape index: {}]
  %s4 = inlined_call_operand.vmem [shape: bf16[256,256], index: 4, kind: input, shape index: {}]
  %s5 = inlined_call_operand.vmem [shape: f32[1,256], index: 5, kind: input, shape index: {}]
  %s6 = inlined_call_operand.vmem [shape: f32[1,256], index: 6, kind: input, shape index: {}]
  %s7 = inlined_call_operand.<no memory space> [shape: f32[1,1], index: 7, kind: input, shape index: {}]
  %s8 = inlined_call_operand.vmem [shape: f32[64,1], index: 8, kind: output, shape index: {}]
  %s9 = sld [smem:[#allocation0]]
  $region42: #{critic_forward.1} parent=0
    _
  %s11 = ssub.s32 1, %s9
  %s12 = scalar_select 0, %s11, %s9
  %v13 = vstv %s7
  %14 = vst [vmem:[#allocation2] sm:$0x1] %v13
  // Predicated region
  $region2: #{critic_forward.1} parent=0 // pred_check
    _
  $region3: #{critic_forward.1} parent=0 // pred_check_branch
    %16 = sbr.rel (0) target = $region5
  $region4: #{critic_forward.1} parent=0 // pred_region
    _
  $region5: #{critic_forward.1} parent=0 // pred_fallthru
    _
  // Predicated region
  $region6: #{critic_forward.1} parent=0 // pred_check
    _
  $region7: #{critic_forward.1} parent=0 // pred_check_branch
    %18 = sbr.rel (0) target = $region9
  $region8: #{critic_forward.1} parent=0 // pred_region
    _
  $region9: #{critic_forward.1} parent=0 // pred_fallthru
    _
  // Predicated region
  $region10: #{critic_forward.1} parent=0 // pred_check
    _
  $region11: #{critic_forward.1} parent=0 // pred_check_branch
    %20 = sbr.rel (0) target = $region13
  $region12: #{critic_forward.1} parent=0 // pred_region
    _
  $region13: #{critic_forward.1} parent=0 // pred_fallthru
    _
  // Predicated region
  $region14: #{critic_forward.1} parent=0 // pred_check
    _
  $region15: #{critic_forward.1} parent=0 // pred_check_branch
    %22 = sbr.rel (0) target = $region17
  $region16: #{critic_forward.1} parent=0 // pred_region
    _
  $region17: #{critic_forward.1} parent=0 // pred_fallthru
    _
  // Predicated region
  $region18: #{critic_forward.1} parent=0 // pred_check
    _
  $region19: #{critic_forward.1} parent=0 // pred_check_branch
    %24 = sbr.rel (0) target = $region21
  $region20: #{critic_forward.1} parent=0 // pred_region
    _
  $region21: #{critic_forward.1} parent=0 // pred_fallthru
    _
  // Predicated region
  $region22: #{critic_forward.1} parent=0 // pred_check
    _
  $region23: #{critic_forward.1} parent=0 // pred_check_branch
    %26 = sbr.rel (0) target = $region25
  $region24: #{critic_forward.1} parent=0 // pred_region
    _
  $region25: #{critic_forward.1} parent=0 // pred_fallthru
    _
  // Predicated region
  $region26: #{critic_forward.1} parent=0 // pred_check
    _
  $region27: #{critic_forward.1} parent=0 // pred_check_branch
    %28 = sbr.rel (0) target = $region29
  $region28: #{critic_forward.1} parent=0 // pred_region
    _
  $region29: #{critic_forward.1} parent=0 // pred_fallthru
    _
  // Predicated region
  $region30: #{critic_forward.1} parent=0 // pred_check
    _
  $region31: #{critic_forward.1} parent=0 // pred_check_branch
    %30 = sbr.rel (0) target = $region33
  $region32: #{critic_forward.1} parent=0 // pred_region
    _
  $region33: #{critic_forward.1} parent=0 // pred_fallthru
    _
  %v32 = vld [vmem:[%s0] sm:$0xf]
  %v33 = vld [vmem:[%s0 + $0x4] sm:$0xf]
  %v34 = vld [vmem:[%s0 + $0x8] sm:$0xf]
  %v35 = vld [vmem:[%s0 + $0xc] sm:$0xf]
  %v36 = vld [vmem:[%s0 + $0x10] sm:$0xf]
  %v37 = vld [vmem:[%s0 + $0x14] sm:$0xf]
  %v38 = vld [vmem:[%s0 + $0x18] sm:$0xf]
  %v39 = vld [vmem:[%s0 + $0x1c] sm:$0xf]
  %v40 = vld [vmem:[%s1] sm:$0xff]
  %v41 = vld [vmem:[%s1 + $0x8] sm:$0xff]
  %v42 = vld [vmem:[%s1 + $0x10] sm:$0xff]
  %v43 = vld [vmem:[%s1 + $0x18] sm:$0xff]
  %v44 = vld [vmem:[%s1 + $0x20] sm:$0xff]
  %v45 = vld [vmem:[%s1 + $0x28] sm:$0xff]
  %v46 = vld [vmem:[%s2] sm:$0xf]
  %v48 = vperm.slane %v46, 0
  %v49 = vperm.slane %v46, 1
  %v50 = vperm.slane %v46, 2
  %v51 = vperm.slane %v46, 3
  %v64 = vunpack.c.l.b16 %v32
  %v65 = vunpack.c.l.b16 %v33
  %v66 = vunpack.c.l.b16 %v34
  %v67 = vunpack.c.l.b16 %v35
  %v68 = vunpack.c.l.b16 %v36
  %v69 = vunpack.c.l.b16 %v37
  %v70 = vunpack.c.l.b16 %v38
  %v71 = vunpack.c.l.b16 %v39
  %v72 = vpack.c.b16 %v65, %v64
  %v73 = vpack.c.b16 %v67, %v66
  %v74 = vpack.c.b16 %v69, %v68
  %v75 = vpack.c.b16 %v71, %v70
  %v82 = vunpack.c.l.b16 %v40
  %v83 = vunpack.c.h.b16 %v40
  %v84 = vunpack.c.l.b16 %v41
  %v85 = vunpack.c.h.b16 %v41
  %v86 = vunpack.c.l.b16 %v42
  %v87 = vunpack.c.h.b16 %v42
  %v88 = vunpack.c.l.b16 %v43
  %v89 = vunpack.c.h.b16 %v43
  %v90 = vunpack.c.l.b16 %v44
  %v91 = vunpack.c.h.b16 %v44
  %v92 = vunpack.c.l.b16 %v45
  %v93 = vunpack.c.h.b16 %v45
  %v94 = vpack.c.b16 %v86, %v82
  %v95 = vpack.c.b16 %v87, %v83
  %v96 = vpack.c.b16 %v88, %v84
  %v97 = vpack.c.b16 %v89, %v85
  %v98 = vpack.c.b16 %v90, %v90
  %v99 = vpack.c.b16 %v91, %v91
  %v100 = vpack.c.b16 %v92, %v92
  %v101 = vpack.c.b16 %v93, %v93
  %vm106 = vcmask 187392
  %v108 = vsel %vm106, %v72, 0
  %v111 = vsel %vm106, %v73, 0
  %v114 = vsel %vm106, %v74, 0
  %v117 = vsel %vm106, %v75, 0
  %vm119 = vcmask 1042432
  %vm120 = vcmask 1043456
  %v121 = vsel %vm119, 4294967295, 65535
  %v122 = vsel %vm120, %v121, 0
  %v124 = vand.u32 %v98, %v122
  %v127 = vand.u32 %v99, %v122
  %v130 = vand.u32 %v100, %v122
  %v133 = vand.u32 %v101, %v122
  %135 = vmatpush.bf16.msra.mxu0 0
  %136 = vmatpush.bf16.msra.mxu0 0
  %137 = vmatpush.bf16.msra.mxu0 0
  %138 = vmatpush.bf16.msra.mxu0 0
  %139 = vmatpush.bf16.msra.mxu0 0
  %140 = vmatpush.bf16.msra.mxu0 0
  %141 = vmatpush.bf16.msra.mxu0 %v124
  %142 = vmatpush.bf16.msra.mxu0 %v94
  %143 = vmatmul.bf16.gmra.mxu0 %v108
  %v144 = vpop.f32.mrf.mxu0
  %v145 = vadd.f32 %v48, %v144
  %v146 = vpop.f32.mrf.mxu0
  %v147 = vadd.f32 %v48, %v146
  %148 = vmatmul.bf16.gmra.mxu0 %v111
  %v149 = vpop.f32.mrf.mxu0
  %v150 = vadd.f32 %v48, %v149
  %v151 = vpop.f32.mrf.mxu0
  %v152 = vadd.f32 %v48, %v151
  %153 = vmatmul.bf16.gmra.mxu0 %v114
  %v154 = vpop.f32.mrf.mxu0
  %v155 = vadd.f32 %v48, %v154
  %v156 = vpop.f32.mrf.mxu0
  %v157 = vadd.f32 %v48, %v156
  %158 = vmatmul.bf16.gmra.mxu0 %v117
  %v159 = vpop.f32.mrf.mxu0
  %v160 = vadd.f32 %v48, %v159
  %v161 = vpop.f32.mrf.mxu0
  %v162 = vadd.f32 %v48, %v161
  %163 = vdwg.mxu0
  %164 = vmatpush.bf16.msra.mxu0 0
  %165 = vmatpush.bf16.msra.mxu0 0
  %166 = vmatpush.bf16.msra.mxu0 0
  %167 = vmatpush.bf16.msra.mxu0 0
  %168 = vmatpush.bf16.msra.mxu0 0
  %169 = vmatpush.bf16.msra.mxu0 0
  %170 = vmatpush.bf16.msra.mxu0 %v127
  %171 = vmatpush.bf16.msra.mxu0 %v95
  %172 = vmatmul.bf16.gmra.mxu0 %v108
  %v173 = vpop.f32.mrf.mxu0
  %v174 = vadd.f32 %v49, %v173
  %v175 = vpop.f32.mrf.mxu0
  %v176 = vadd.f32 %v49, %v175
  %177 = vmatmul.bf16.gmra.mxu0 %v111
  %v178 = vpop.f32.mrf.mxu0
  %v179 = vadd.f32 %v49, %v178
  %v180 = vpop.f32.mrf.mxu0
  %v181 = vadd.f32 %v49, %v180
  %182 = vmatmul.bf16.gmra.mxu0 %v114
  %v183 = vpop.f32.mrf.mxu0
  %v184 = vadd.f32 %v49, %v183
  %v185 = vpop.f32.mrf.mxu0
  %v186 = vadd.f32 %v49, %v185
  %187 = vmatmul.bf16.gmra.mxu0 %v117
  %v188 = vpop.f32.mrf.mxu0
  %v189 = vadd.f32 %v49, %v188
  %v190 = vpop.f32.mrf.mxu0
  %v191 = vadd.f32 %v49, %v190
  %192 = vdwg.mxu0
  %193 = vmatpush.bf16.msra.mxu0 0
  %194 = vmatpush.bf16.msra.mxu0 0
  %195 = vmatpush.bf16.msra.mxu0 0
  %196 = vmatpush.bf16.msra.mxu0 0
  %197 = vmatpush.bf16.msra.mxu0 0
  %198 = vmatpush.bf16.msra.mxu0 0
  %199 = vmatpush.bf16.msra.mxu0 %v130
  %200 = vmatpush.bf16.msra.mxu0 %v96
  %201 = vmatmul.bf16.gmra.mxu0 %v108
  %v202 = vpop.f32.mrf.mxu0
  %v203 = vadd.f32 %v50, %v202
  %v204 = vpop.f32.mrf.mxu0
  %v205 = vadd.f32 %v50, %v204
  %206 = vmatmul.bf16.gmra.mxu0 %v111
  %v207 = vpop.f32.mrf.mxu0
  %v208 = vadd.f32 %v50, %v207
  %v209 = vpop.f32.mrf.mxu0
  %v210 = vadd.f32 %v50, %v209
  %211 = vmatmul.bf16.gmra.mxu0 %v114
  %v212 = vpop.f32.mrf.mxu0
  %v213 = vadd.f32 %v50, %v212
  %v214 = vpop.f32.mrf.mxu0
  %v215 = vadd.f32 %v50, %v214
  %216 = vmatmul.bf16.gmra.mxu0 %v117
  %v217 = vpop.f32.mrf.mxu0
  %v218 = vadd.f32 %v50, %v217
  %v219 = vpop.f32.mrf.mxu0
  %v220 = vadd.f32 %v50, %v219
  %221 = vdwg.mxu0
  %222 = vmatpush.bf16.msra.mxu0 0
  %223 = vmatpush.bf16.msra.mxu0 0
  %224 = vmatpush.bf16.msra.mxu0 0
  %225 = vmatpush.bf16.msra.mxu0 0
  %226 = vmatpush.bf16.msra.mxu0 0
  %227 = vmatpush.bf16.msra.mxu0 0
  %228 = vmatpush.bf16.msra.mxu0 %v133
  %229 = vmatpush.bf16.msra.mxu0 %v97
  %230 = vmatmul.bf16.gmra.mxu0 %v108
  %v231 = vpop.f32.mrf.mxu0
  %v232 = vadd.f32 %v51, %v231
  %v233 = vpop.f32.mrf.mxu0
  %v234 = vadd.f32 %v51, %v233
  %235 = vmatmul.bf16.gmra.mxu0 %v111
  %v236 = vpop.f32.mrf.mxu0
  %v237 = vadd.f32 %v51, %v236
  %v238 = vpop.f32.mrf.mxu0
  %v239 = vadd.f32 %v51, %v238
  %240 = vmatmul.bf16.gmra.mxu0 %v114
  %v241 = vpop.f32.mrf.mxu0
  %v242 = vadd.f32 %v51, %v241
  %v243 = vpop.f32.mrf.mxu0
  %v244 = vadd.f32 %v51, %v243
  %245 = vmatmul.bf16.gmra.mxu0 %v117
  %v246 = vpop.f32.mrf.mxu0
  %v247 = vadd.f32 %v51, %v246
  %v248 = vpop.f32.mrf.mxu0
  %v249 = vadd.f32 %v51, %v248
  %250 = vdwg.mxu0
  %v251 = vmax.f32 %v145, 0.0
  %v252 = vmax.f32 %v174, 0.0
  %v253 = vmax.f32 %v147, 0.0
  %v254 = vmax.f32 %v176, 0.0
  %v255 = vmax.f32 %v150, 0.0
  %v256 = vmax.f32 %v179, 0.0
  %v257 = vmax.f32 %v152, 0.0
  %v258 = vmax.f32 %v181, 0.0
  %v259 = vmax.f32 %v155, 0.0
  %v260 = vmax.f32 %v184, 0.0
  %v261 = vmax.f32 %v157, 0.0
  %v262 = vmax.f32 %v186, 0.0
  %v263 = vmax.f32 %v160, 0.0
  %v264 = vmax.f32 %v189, 0.0
  %v265 = vmax.f32 %v162, 0.0
  %v266 = vmax.f32 %v191, 0.0
  %v267 = vpack.c.bf16 %v253, %v251
  %v268 = vpack.c.bf16 %v254, %v252
  %v269 = vpack.c.bf16 %v257, %v255
  %v270 = vpack.c.bf16 %v258, %v256
  %v271 = vpack.c.bf16 %v261, %v259
  %v272 = vpack.c.bf16 %v262, %v260
  %v273 = vpack.c.bf16 %v265, %v263
  %v274 = vpack.c.bf16 %v266, %v264
  %v275 = vld [vmem:[%s3] sm:$0xff]
  %v276 = vld [vmem:[%s3 + $0x8] sm:$0xff]
  %v277 = vld [vmem:[%s3 + $0x10] sm:$0xff]
  %v278 = vld [vmem:[%s3 + $0x18] sm:$0xff]
  %v279 = vld [vmem:[%s3 + $0x20] sm:$0xff]
  %v280 = vld [vmem:[%s3 + $0x28] sm:$0xff]
  %v281 = vld [vmem:[%s3 + $0x30] sm:$0xff]
  %v282 = vld [vmem:[%s3 + $0x38] sm:$0xff]
  %v283 = vld [vmem:[%s3 + $0x40] sm:$0xff]
  %v284 = vld [vmem:[%s3 + $0x48] sm:$0xff]
  %v285 = vld [vmem:[%s3 + $0x50] sm:$0xff]
  %v286 = vld [vmem:[%s3 + $0x58] sm:$0xff]
  %v287 = vld [vmem:[%s3 + $0x60] sm:$0xff]
  %v288 = vld [vmem:[%s3 + $0x68] sm:$0xff]
  %v289 = vld [vmem:[%s3 + $0x70] sm:$0xff]
  %v290 = vld [vmem:[%s3 + $0x78] sm:$0xff]
  %v291 = vld [vmem:[%s3 + $0x80] sm:$0xff]
  %v292 = vld [vmem:[%s3 + $0x88] sm:$0xff]
  %v293 = vld [vmem:[%s3 + $0x90] sm:$0xff]
  %v294 = vld [vmem:[%s3 + $0x98] sm:$0xff]
  %v295 = vld [vmem:[%s3 + $0xa0] sm:$0xff]
  %v296 = vld [vmem:[%s3 + $0xa8] sm:$0xff]
  %v297 = vld [vmem:[%s3 + $0xb0] sm:$0xff]
  %v298 = vld [vmem:[%s3 + $0xb8] sm:$0xff]
  %v299 = vld [vmem:[%s3 + $0xc0] sm:$0xff]
  %v300 = vld [vmem:[%s3 + $0xc8] sm:$0xff]
  %v301 = vld [vmem:[%s3 + $0xd0] sm:$0xff]
  %v302 = vld [vmem:[%s3 + $0xd8] sm:$0xff]
  %v303 = vld [vmem:[%s3 + $0xe0] sm:$0xff]
  %v304 = vld [vmem:[%s3 + $0xe8] sm:$0xff]
  %v305 = vld [vmem:[%s3 + $0xf0] sm:$0xff]
  %v306 = vld [vmem:[%s3 + $0xf8] sm:$0xff]
  %v339 = vunpack.c.l.b16 %v275
  %v340 = vunpack.c.h.b16 %v275
  %v341 = vunpack.c.l.b16 %v276
  %v342 = vunpack.c.h.b16 %v276
  %v343 = vunpack.c.l.b16 %v277
  %v344 = vunpack.c.h.b16 %v277
  %v345 = vunpack.c.l.b16 %v278
  %v346 = vunpack.c.h.b16 %v278
  %v347 = vunpack.c.l.b16 %v279
  %v348 = vunpack.c.h.b16 %v279
  %v349 = vunpack.c.l.b16 %v280
  %v350 = vunpack.c.h.b16 %v280
  %v351 = vunpack.c.l.b16 %v281
  %v352 = vunpack.c.h.b16 %v281
  %v353 = vunpack.c.l.b16 %v282
  %v354 = vunpack.c.h.b16 %v282
  %v355 = vunpack.c.l.b16 %v283
  %v356 = vunpack.c.h.b16 %v283
  %v357 = vunpack.c.l.b16 %v284
  %v358 = vunpack.c.h.b16 %v284
  %v359 = vunpack.c.l.b16 %v285
  %v360 = vunpack.c.h.b16 %v285
  %v361 = vunpack.c.l.b16 %v286
  %v362 = vunpack.c.h.b16 %v286
  %v363 = vunpack.c.l.b16 %v287
  %v364 = vunpack.c.h.b16 %v287
  %v365 = vunpack.c.l.b16 %v288
  %v366 = vunpack.c.h.b16 %v288
  %v367 = vunpack.c.l.b16 %v289
  %v368 = vunpack.c.h.b16 %v289
  %v369 = vunpack.c.l.b16 %v290
  %v370 = vunpack.c.h.b16 %v290
  %v371 = vunpack.c.l.b16 %v291
  %v372 = vunpack.c.h.b16 %v291
  %v373 = vunpack.c.l.b16 %v292
  %v374 = vunpack.c.h.b16 %v292
  %v375 = vunpack.c.l.b16 %v293
  %v376 = vunpack.c.h.b16 %v293
  %v377 = vunpack.c.l.b16 %v294
  %v378 = vunpack.c.h.b16 %v294
  %v379 = vunpack.c.l.b16 %v295
  %v380 = vunpack.c.h.b16 %v295
  %v381 = vunpack.c.l.b16 %v296
  %v382 = vunpack.c.h.b16 %v296
  %v383 = vunpack.c.l.b16 %v297
  %v384 = vunpack.c.h.b16 %v297
  %v385 = vunpack.c.l.b16 %v298
  %v386 = vunpack.c.h.b16 %v298
  %v387 = vunpack.c.l.b16 %v299
  %v388 = vunpack.c.h.b16 %v299
  %v389 = vunpack.c.l.b16 %v300
  %v390 = vunpack.c.h.b16 %v300
  %v391 = vunpack.c.l.b16 %v301
  %v392 = vunpack.c.h.b16 %v301
  %v393 = vunpack.c.l.b16 %v302
  %v394 = vunpack.c.h.b16 %v302
  %v395 = vunpack.c.l.b16 %v303
  %v396 = vunpack.c.h.b16 %v303
  %v397 = vunpack.c.l.b16 %v304
  %v398 = vunpack.c.h.b16 %v304
  %v399 = vunpack.c.l.b16 %v305
  %v400 = vunpack.c.h.b16 %v305
  %v401 = vunpack.c.l.b16 %v306
  %v402 = vunpack.c.h.b16 %v306
  %v403 = vpack.c.b16 %v341, %v339
  %v404 = vpack.c.b16 %v342, %v340
  %v405 = vpack.c.b16 %v345, %v343
  %v406 = vpack.c.b16 %v346, %v344
  %v407 = vpack.c.b16 %v349, %v347
  %v408 = vpack.c.b16 %v350, %v348
  %v409 = vpack.c.b16 %v353, %v351
  %v410 = vpack.c.b16 %v354, %v352
  %v411 = vpack.c.b16 %v357, %v355
  %v412 = vpack.c.b16 %v358, %v356
  %v413 = vpack.c.b16 %v361, %v359
  %v414 = vpack.c.b16 %v362, %v360
  %v415 = vpack.c.b16 %v365, %v363
  %v416 = vpack.c.b16 %v366, %v364
  %v417 = vpack.c.b16 %v369, %v367
  %v418 = vpack.c.b16 %v370, %v368
  %v419 = vpack.c.b16 %v373, %v371
  %v420 = vpack.c.b16 %v374, %v372
  %v421 = vpack.c.b16 %v377, %v375
  %v422 = vpack.c.b16 %v378, %v376
  %v423 = vpack.c.b16 %v381, %v379
  %v424 = vpack.c.b16 %v382, %v380
  %v425 = vpack.c.b16 %v385, %v383
  %v426 = vpack.c.b16 %v386, %v384
  %v427 = vpack.c.b16 %v389, %v387
  %v428 = vpack.c.b16 %v390, %v388
  %v429 = vpack.c.b16 %v393, %v391
  %v430 = vpack.c.b16 %v394, %v392
  %v431 = vpack.c.b16 %v397, %v395
  %v432 = vpack.c.b16 %v398, %v396
  %v433 = vpack.c.b16 %v401, %v399
  %v434 = vpack.c.b16 %v402, %v400
  %467 = vmatpush.bf16.msra.mxu0 %v417
  %468 = vmatpush.bf16.msra.mxu0 %v415
  %469 = vmatpush.bf16.msra.mxu0 %v413
  %470 = vmatpush.bf16.msra.mxu0 %v411
  %471 = vmatpush.bf16.msra.mxu0 %v409
  %472 = vmatpush.bf16.msra.mxu0 %v407
  %473 = vmatpush.bf16.msra.mxu0 %v405
  %474 = vmatpush.bf16.msra.mxu0 %v403
  %475 = vmatmul.bf16.gmra.mxu0 %v267
  %v476 = vpop.f32.mrf.mxu0
  %v477 = vadd.f32 %v203, %v476
  %v478 = vpop.f32.mrf.mxu0
  %v479 = vadd.f32 %v205, %v478
  %480 = vmatmul.bf16.gmra.mxu0 %v269
  %v481 = vpop.f32.mrf.mxu0
  %v482 = vadd.f32 %v208, %v481
  %v483 = vpop.f32.mrf.mxu0
  %v484 = vadd.f32 %v210, %v483
  %485 = vmatmul.bf16.gmra.mxu0 %v271
  %v486 = vpop.f32.mrf.mxu0
  %v487 = vadd.f32 %v213, %v486
  %v488 = vpop.f32.mrf.mxu0
  %v489 = vadd.f32 %v215, %v488
  %490 = vmatmul.bf16.gmra.mxu0 %v273
  %v491 = vpop.f32.mrf.mxu0
  %v492 = vadd.f32 %v218, %v491
  %v493 = vpop.f32.mrf.mxu0
  %v494 = vadd.f32 %v220, %v493
  %495 = vdwg.mxu0
  %496 = vmatpush.bf16.msra.mxu0 %v433
  %497 = vmatpush.bf16.msra.mxu0 %v431
  %498 = vmatpush.bf16.msra.mxu0 %v429
  %499 = vmatpush.bf16.msra.mxu0 %v427
  %500 = vmatpush.bf16.msra.mxu0 %v425
  %501 = vmatpush.bf16.msra.mxu0 %v423
  %502 = vmatpush.bf16.msra.mxu0 %v421
  %503 = vmatpush.bf16.msra.mxu0 %v419
  %504 = vmatmul.bf16.gmra.mxu0 %v268
  %v505 = vpop.f32.mrf.mxu0
  %v506 = vadd.f32 %v477, %v505
  %v507 = vpop.f32.mrf.mxu0
  %v508 = vadd.f32 %v479, %v507
  %509 = vmatmul.bf16.gmra.mxu0 %v270
  %v510 = vpop.f32.mrf.mxu0
  %v511 = vadd.f32 %v482, %v510
  %v512 = vpop.f32.mrf.mxu0
  %v513 = vadd.f32 %v484, %v512
  %514 = vmatmul.bf16.gmra.mxu0 %v272
  %v515 = vpop.f32.mrf.mxu0
  %v516 = vadd.f32 %v487, %v515
  %v517 = vpop.f32.mrf.mxu0
  %v518 = vadd.f32 %v489, %v517
  %519 = vmatmul.bf16.gmra.mxu0 %v274
  %v520 = vpop.f32.mrf.mxu0
  %v521 = vadd.f32 %v492, %v520
  %v522 = vpop.f32.mrf.mxu0
  %v523 = vadd.f32 %v494, %v522
  %524 = vdwg.mxu0
  %525 = vmatpush.bf16.msra.mxu0 %v418
  %526 = vmatpush.bf16.msra.mxu0 %v416
  %527 = vmatpush.bf16.msra.mxu0 %v414
  %528 = vmatpush.bf16.msra.mxu0 %v412
  %529 = vmatpush.bf16.msra.mxu0 %v410
  %530 = vmatpush.bf16.msra.mxu0 %v408
  %531 = vmatpush.bf16.msra.mxu0 %v406
  %532 = vmatpush.bf16.msra.mxu0 %v404
  %533 = vmatmul.bf16.gmra.mxu0 %v267
  %v534 = vpop.f32.mrf.mxu0
  %v535 = vadd.f32 %v232, %v534
  %v536 = vpop.f32.mrf.mxu0
  %v537 = vadd.f32 %v234, %v536
  %538 = vmatmul.bf16.gmra.mxu0 %v269
  %v539 = vpop.f32.mrf.mxu0
  %v540 = vadd.f32 %v237, %v539
  %v541 = vpop.f32.mrf.mxu0
  %v542 = vadd.f32 %v239, %v541
  %543 = vmatmul.bf16.gmra.mxu0 %v271
  %v544 = vpop.f32.mrf.mxu0
  %v545 = vadd.f32 %v242, %v544
  %v546 = vpop.f32.mrf.mxu0
  %v547 = vadd.f32 %v244, %v546
  %548 = vmatmul.bf16.gmra.mxu0 %v273
  %v549 = vpop.f32.mrf.mxu0
  %v550 = vadd.f32 %v247, %v549
  %v551 = vpop.f32.mrf.mxu0
  %v552 = vadd.f32 %v249, %v551
  %553 = vdwg.mxu0
  %554 = vmatpush.bf16.msra.mxu0 %v434
  %555 = vmatpush.bf16.msra.mxu0 %v432
  %556 = vmatpush.bf16.msra.mxu0 %v430
  %557 = vmatpush.bf16.msra.mxu0 %v428
  %558 = vmatpush.bf16.msra.mxu0 %v426
  %559 = vmatpush.bf16.msra.mxu0 %v424
  %560 = vmatpush.bf16.msra.mxu0 %v422
  %561 = vmatpush.bf16.msra.mxu0 %v420
  %562 = vmatmul.bf16.gmra.mxu0 %v268
  %v563 = vpop.f32.mrf.mxu0
  %v564 = vadd.f32 %v535, %v563
  %v565 = vpop.f32.mrf.mxu0
  %v566 = vadd.f32 %v537, %v565
  %567 = vmatmul.bf16.gmra.mxu0 %v270
  %v568 = vpop.f32.mrf.mxu0
  %v569 = vadd.f32 %v540, %v568
  %v570 = vpop.f32.mrf.mxu0
  %v571 = vadd.f32 %v542, %v570
  %572 = vmatmul.bf16.gmra.mxu0 %v272
  %v573 = vpop.f32.mrf.mxu0
  %v574 = vadd.f32 %v545, %v573
  %v575 = vpop.f32.mrf.mxu0
  %v576 = vadd.f32 %v547, %v575
  %577 = vmatmul.bf16.gmra.mxu0 %v274
  %v578 = vpop.f32.mrf.mxu0
  %v579 = vadd.f32 %v550, %v578
  %v580 = vpop.f32.mrf.mxu0
  %v581 = vadd.f32 %v552, %v580
  %582 = vdwg.mxu0
  %v583 = vmax.f32 %v506, 0.0
  %v584 = vmax.f32 %v564, 0.0
  %v585 = vmax.f32 %v508, 0.0
  %v586 = vmax.f32 %v566, 0.0
  %v587 = vmax.f32 %v511, 0.0
  %v588 = vmax.f32 %v569, 0.0
  %v589 = vmax.f32 %v513, 0.0
  %v590 = vmax.f32 %v571, 0.0
  %v591 = vmax.f32 %v516, 0.0
  %v592 = vmax.f32 %v574, 0.0
  %v593 = vmax.f32 %v518, 0.0
  %v594 = vmax.f32 %v576, 0.0
  %v595 = vmax.f32 %v521, 0.0
  %v596 = vmax.f32 %v579, 0.0
  %v597 = vmax.f32 %v523, 0.0
  %v598 = vmax.f32 %v581, 0.0
  %v599 = vpack.c.bf16 %v585, %v583
  %v600 = vpack.c.bf16 %v586, %v584
  %v601 = vpack.c.bf16 %v589, %v587
  %v602 = vpack.c.bf16 %v590, %v588
  %v603 = vpack.c.bf16 %v593, %v591
  %v604 = vpack.c.bf16 %v594, %v592
  %v605 = vpack.c.bf16 %v597, %v595
  %v606 = vpack.c.bf16 %v598, %v596
  %v607 = vld [vmem:[%s4] sm:$0xff]
  %v608 = vld [vmem:[%s4 + $0x8] sm:$0xff]
  %v609 = vld [vmem:[%s4 + $0x10] sm:$0xff]
  %v610 = vld [vmem:[%s4 + $0x18] sm:$0xff]
  %v611 = vld [vmem:[%s4 + $0x20] sm:$0xff]
  %v612 = vld [vmem:[%s4 + $0x28] sm:$0xff]
  %v613 = vld [vmem:[%s4 + $0x30] sm:$0xff]
  %v614 = vld [vmem:[%s4 + $0x38] sm:$0xff]
  %v615 = vld [vmem:[%s4 + $0x40] sm:$0xff]
  %v616 = vld [vmem:[%s4 + $0x48] sm:$0xff]
  %v617 = vld [vmem:[%s4 + $0x50] sm:$0xff]
  %v618 = vld [vmem:[%s4 + $0x58] sm:$0xff]
  %v619 = vld [vmem:[%s4 + $0x60] sm:$0xff]
  %v620 = vld [vmem:[%s4 + $0x68] sm:$0xff]
  %v621 = vld [vmem:[%s4 + $0x70] sm:$0xff]
  %v622 = vld [vmem:[%s4 + $0x78] sm:$0xff]
  %v623 = vld [vmem:[%s4 + $0x80] sm:$0xff]
  %v624 = vld [vmem:[%s4 + $0x88] sm:$0xff]
  %v625 = vld [vmem:[%s4 + $0x90] sm:$0xff]
  %v626 = vld [vmem:[%s4 + $0x98] sm:$0xff]
  %v627 = vld [vmem:[%s4 + $0xa0] sm:$0xff]
  %v628 = vld [vmem:[%s4 + $0xa8] sm:$0xff]
  %v629 = vld [vmem:[%s4 + $0xb0] sm:$0xff]
  %v630 = vld [vmem:[%s4 + $0xb8] sm:$0xff]
  %v631 = vld [vmem:[%s4 + $0xc0] sm:$0xff]
  %v632 = vld [vmem:[%s4 + $0xc8] sm:$0xff]
  %v633 = vld [vmem:[%s4 + $0xd0] sm:$0xff]
  %v634 = vld [vmem:[%s4 + $0xd8] sm:$0xff]
  %v635 = vld [vmem:[%s4 + $0xe0] sm:$0xff]
  %v636 = vld [vmem:[%s4 + $0xe8] sm:$0xff]
  %v637 = vld [vmem:[%s4 + $0xf0] sm:$0xff]
  %v638 = vld [vmem:[%s4 + $0xf8] sm:$0xff]
  %v639 = vld [vmem:[%s5] sm:$0x3]
  %v641 = vperm.slane %v639, 0
  %v642 = vperm.slane %v639, 1
  %v677 = vunpack.c.l.b16 %v607
  %v678 = vunpack.c.h.b16 %v607
  %v679 = vunpack.c.l.b16 %v608
  %v680 = vunpack.c.h.b16 %v608
  %v681 = vunpack.c.l.b16 %v609
  %v682 = vunpack.c.h.b16 %v609
  %v683 = vunpack.c.l.b16 %v610
  %v684 = vunpack.c.h.b16 %v610
  %v685 = vunpack.c.l.b16 %v611
  %v686 = vunpack.c.h.b16 %v611
  %v687 = vunpack.c.l.b16 %v612
  %v688 = vunpack.c.h.b16 %v612
  %v689 = vunpack.c.l.b16 %v613
  %v690 = vunpack.c.h.b16 %v613
  %v691 = vunpack.c.l.b16 %v614
  %v692 = vunpack.c.h.b16 %v614
  %v693 = vunpack.c.l.b16 %v615
  %v694 = vunpack.c.h.b16 %v615
  %v695 = vunpack.c.l.b16 %v616
  %v696 = vunpack.c.h.b16 %v616
  %v697 = vunpack.c.l.b16 %v617
  %v698 = vunpack.c.h.b16 %v617
  %v699 = vunpack.c.l.b16 %v618
  %v700 = vunpack.c.h.b16 %v618
  %v701 = vunpack.c.l.b16 %v619
  %v702 = vunpack.c.h.b16 %v619
  %v703 = vunpack.c.l.b16 %v620
  %v704 = vunpack.c.h.b16 %v620
  %v705 = vunpack.c.l.b16 %v621
  %v706 = vunpack.c.h.b16 %v621
  %v707 = vunpack.c.l.b16 %v622
  %v708 = vunpack.c.h.b16 %v622
  %v709 = vunpack.c.l.b16 %v623
  %v710 = vunpack.c.h.b16 %v623
  %v711 = vunpack.c.l.b16 %v624
  %v712 = vunpack.c.h.b16 %v624
  %v713 = vunpack.c.l.b16 %v625
  %v714 = vunpack.c.h.b16 %v625
  %v715 = vunpack.c.l.b16 %v626
  %v716 = vunpack.c.h.b16 %v626
  %v717 = vunpack.c.l.b16 %v627
  %v718 = vunpack.c.h.b16 %v627
  %v719 = vunpack.c.l.b16 %v628
  %v720 = vunpack.c.h.b16 %v628
  %v721 = vunpack.c.l.b16 %v629
  %v722 = vunpack.c.h.b16 %v629
  %v723 = vunpack.c.l.b16 %v630
  %v724 = vunpack.c.h.b16 %v630
  %v725 = vunpack.c.l.b16 %v631
  %v726 = vunpack.c.h.b16 %v631
  %v727 = vunpack.c.l.b16 %v632
  %v728 = vunpack.c.h.b16 %v632
  %v729 = vunpack.c.l.b16 %v633
  %v730 = vunpack.c.h.b16 %v633
  %v731 = vunpack.c.l.b16 %v634
  %v732 = vunpack.c.h.b16 %v634
  %v733 = vunpack.c.l.b16 %v635
  %v734 = vunpack.c.h.b16 %v635
  %v735 = vunpack.c.l.b16 %v636
  %v736 = vunpack.c.h.b16 %v636
  %v737 = vunpack.c.l.b16 %v637
  %v738 = vunpack.c.h.b16 %v637
  %v739 = vunpack.c.l.b16 %v638
  %v740 = vunpack.c.h.b16 %v638
  %v741 = vpack.c.b16 %v679, %v677
  %v742 = vpack.c.b16 %v680, %v678
  %v743 = vpack.c.b16 %v683, %v681
  %v744 = vpack.c.b16 %v684, %v682
  %v745 = vpack.c.b16 %v687, %v685
  %v746 = vpack.c.b16 %v688, %v686
  %v747 = vpack.c.b16 %v691, %v689
  %v748 = vpack.c.b16 %v692, %v690
  %v749 = vpack.c.b16 %v695, %v693
  %v750 = vpack.c.b16 %v696, %v694
  %v751 = vpack.c.b16 %v699, %v697
  %v752 = vpack.c.b16 %v700, %v698
  %v753 = vpack.c.b16 %v703, %v701
  %v754 = vpack.c.b16 %v704, %v702
  %v755 = vpack.c.b16 %v707, %v705
  %v756 = vpack.c.b16 %v708, %v706
  %v757 = vpack.c.b16 %v711, %v709
  %v758 = vpack.c.b16 %v712, %v710
  %v759 = vpack.c.b16 %v715, %v713
  %v760 = vpack.c.b16 %v716, %v714
  %v761 = vpack.c.b16 %v719, %v717
  %v762 = vpack.c.b16 %v720, %v718
  %v763 = vpack.c.b16 %v723, %v721
  %v764 = vpack.c.b16 %v724, %v722
  %v765 = vpack.c.b16 %v727, %v725
  %v766 = vpack.c.b16 %v728, %v726
  %v767 = vpack.c.b16 %v731, %v729
  %v768 = vpack.c.b16 %v732, %v730
  %v769 = vpack.c.b16 %v735, %v733
  %v770 = vpack.c.b16 %v736, %v734
  %v771 = vpack.c.b16 %v739, %v737
  %v772 = vpack.c.b16 %v740, %v738
  %805 = vmatpush.bf16.msra.mxu0 %v755
  %806 = vmatpush.bf16.msra.mxu0 %v753
  %807 = vmatpush.bf16.msra.mxu0 %v751
  %808 = vmatpush.bf16.msra.mxu0 %v749
  %809 = vmatpush.bf16.msra.mxu0 %v747
  %810 = vmatpush.bf16.msra.mxu0 %v745
  %811 = vmatpush.bf16.msra.mxu0 %v743
  %812 = vmatpush.bf16.msra.mxu0 %v741
  %813 = vmatmul.bf16.gmra.mxu0 %v599
  %v814 = vpop.f32.mrf.mxu0
  %v815 = vadd.f32 %v641, %v814
  %v816 = vpop.f32.mrf.mxu0
  %v817 = vadd.f32 %v641, %v816
  %818 = vmatmul.bf16.gmra.mxu0 %v601
  %v819 = vpop.f32.mrf.mxu0
  %v820 = vadd.f32 %v641, %v819
  %v821 = vpop.f32.mrf.mxu0
  %v822 = vadd.f32 %v641, %v821
  %823 = vmatmul.bf16.gmra.mxu0 %v603
  %v824 = vpop.f32.mrf.mxu0
  %v825 = vadd.f32 %v641, %v824
  %v826 = vpop.f32.mrf.mxu0
  %v827 = vadd.f32 %v641, %v826
  %828 = vmatmul.bf16.gmra.mxu0 %v605
  %v829 = vpop.f32.mrf.mxu0
  %v830 = vadd.f32 %v641, %v829
  %v831 = vpop.f32.mrf.mxu0
  %v832 = vadd.f32 %v641, %v831
  %833 = vdwg.mxu0
  %834 = vmatpush.bf16.msra.mxu0 %v771
  %835 = vmatpush.bf16.msra.mxu0 %v769
  %836 = vmatpush.bf16.msra.mxu0 %v767
  %837 = vmatpush.bf16.msra.mxu0 %v765
  %838 = vmatpush.bf16.msra.mxu0 %v763
  %839 = vmatpush.bf16.msra.mxu0 %v761
  %840 = vmatpush.bf16.msra.mxu0 %v759
  %841 = vmatpush.bf16.msra.mxu0 %v757
  %842 = vmatmul.bf16.gmra.mxu0 %v600
  %v843 = vpop.f32.mrf.mxu0
  %v844 = vadd.f32 %v815, %v843
  %v845 = vpop.f32.mrf.mxu0
  %v846 = vadd.f32 %v817, %v845
  %847 = vmatmul.bf16.gmra.mxu0 %v602
  %v848 = vpop.f32.mrf.mxu0
  %v849 = vadd.f32 %v820, %v848
  %v850 = vpop.f32.mrf.mxu0
  %v851 = vadd.f32 %v822, %v850
  %852 = vmatmul.bf16.gmra.mxu0 %v604
  %v853 = vpop.f32.mrf.mxu0
  %v854 = vadd.f32 %v825, %v853
  %v855 = vpop.f32.mrf.mxu0
  %v856 = vadd.f32 %v827, %v855
  %857 = vmatmul.bf16.gmra.mxu0 %v606
  %v858 = vpop.f32.mrf.mxu0
  %v859 = vadd.f32 %v830, %v858
  %v860 = vpop.f32.mrf.mxu0
  %v861 = vadd.f32 %v832, %v860
  %862 = vdwg.mxu0
  %863 = vmatpush.bf16.msra.mxu0 %v756
  %864 = vmatpush.bf16.msra.mxu0 %v754
  %865 = vmatpush.bf16.msra.mxu0 %v752
  %866 = vmatpush.bf16.msra.mxu0 %v750
  %867 = vmatpush.bf16.msra.mxu0 %v748
  %868 = vmatpush.bf16.msra.mxu0 %v746
  %869 = vmatpush.bf16.msra.mxu0 %v744
  %870 = vmatpush.bf16.msra.mxu0 %v742
  %871 = vmatmul.bf16.gmra.mxu0 %v599
  %v872 = vpop.f32.mrf.mxu0
  %v873 = vadd.f32 %v642, %v872
  %v874 = vpop.f32.mrf.mxu0
  %v875 = vadd.f32 %v642, %v874
  %876 = vmatmul.bf16.gmra.mxu0 %v601
  %v877 = vpop.f32.mrf.mxu0
  %v878 = vadd.f32 %v642, %v877
  %v879 = vpop.f32.mrf.mxu0
  %v880 = vadd.f32 %v642, %v879
  %881 = vmatmul.bf16.gmra.mxu0 %v603
  %v882 = vpop.f32.mrf.mxu0
  %v883 = vadd.f32 %v642, %v882
  %v884 = vpop.f32.mrf.mxu0
  %v885 = vadd.f32 %v642, %v884
  %886 = vmatmul.bf16.gmra.mxu0 %v605
  %v887 = vpop.f32.mrf.mxu0
  %v888 = vadd.f32 %v642, %v887
  %v889 = vpop.f32.mrf.mxu0
  %v890 = vadd.f32 %v642, %v889
  %891 = vdwg.mxu0
  %892 = vmatpush.bf16.msra.mxu0 %v772
  %893 = vmatpush.bf16.msra.mxu0 %v770
  %894 = vmatpush.bf16.msra.mxu0 %v768
  %895 = vmatpush.bf16.msra.mxu0 %v766
  %896 = vmatpush.bf16.msra.mxu0 %v764
  %897 = vmatpush.bf16.msra.mxu0 %v762
  %898 = vmatpush.bf16.msra.mxu0 %v760
  %899 = vmatpush.bf16.msra.mxu0 %v758
  %900 = vmatmul.bf16.gmra.mxu0 %v600
  %v901 = vpop.f32.mrf.mxu0
  %v902 = vadd.f32 %v873, %v901
  %v903 = vpop.f32.mrf.mxu0
  %v904 = vadd.f32 %v875, %v903
  %905 = vmatmul.bf16.gmra.mxu0 %v602
  %v906 = vpop.f32.mrf.mxu0
  %v907 = vadd.f32 %v878, %v906
  %v908 = vpop.f32.mrf.mxu0
  %v909 = vadd.f32 %v880, %v908
  %910 = vmatmul.bf16.gmra.mxu0 %v604
  %v911 = vpop.f32.mrf.mxu0
  %v912 = vadd.f32 %v883, %v911
  %v913 = vpop.f32.mrf.mxu0
  %v914 = vadd.f32 %v885, %v913
  %915 = vmatmul.bf16.gmra.mxu0 %v606
  %v916 = vpop.f32.mrf.mxu0
  %v917 = vadd.f32 %v888, %v916
  %v918 = vpop.f32.mrf.mxu0
  %v919 = vadd.f32 %v890, %v918
  %920 = vdwg.mxu0
  %v921 = vmax.f32 %v844, 0.0
  %v922 = vmax.f32 %v902, 0.0
  %v923 = vmax.f32 %v846, 0.0
  %v924 = vmax.f32 %v904, 0.0
  %v925 = vmax.f32 %v849, 0.0
  %v926 = vmax.f32 %v907, 0.0
  %v927 = vmax.f32 %v851, 0.0
  %v928 = vmax.f32 %v909, 0.0
  %v929 = vmax.f32 %v854, 0.0
  %v930 = vmax.f32 %v912, 0.0
  %v931 = vmax.f32 %v856, 0.0
  %v932 = vmax.f32 %v914, 0.0
  %v933 = vmax.f32 %v859, 0.0
  %v934 = vmax.f32 %v917, 0.0
  %v935 = vmax.f32 %v861, 0.0
  %v936 = vmax.f32 %v919, 0.0
  %v937 = vld [vmem:[%s6] sm:$0x3]
  %v939 = vperm.slane %v937, 0
  %v940 = vperm.slane %v937, 1
  %v943 = vmul.f32 %v921, %v939
  %v944 = vmul.f32 %v922, %v940
  %v945 = vmul.f32 %v923, %v939
  %v946 = vmul.f32 %v924, %v940
  %v947 = vmul.f32 %v925, %v939
  %v948 = vmul.f32 %v926, %v940
  %v949 = vmul.f32 %v927, %v939
  %v950 = vmul.f32 %v928, %v940
  %v951 = vmul.f32 %v929, %v939
  %v952 = vmul.f32 %v930, %v940
  %v953 = vmul.f32 %v931, %v939
  %v954 = vmul.f32 %v932, %v940
  %v955 = vmul.f32 %v933, %v939
  %v956 = vmul.f32 %v934, %v940
  %v957 = vmul.f32 %v935, %v939
  %v958 = vmul.f32 %v936, %v940
  %v959 = vadd.f32 %v943, %v944
  %960 = vadd.xlane.f32.xlu0 %v959
  %v961 = vpop.xlane.xlu0 %960
  %v962 = vadd.f32 %v945, %v946
  %963 = vadd.xlane.f32.xlu0 %v962
  %v964 = vpop.xlane.xlu0 %963
  %v965 = vadd.f32 %v947, %v948
  %966 = vadd.xlane.f32.xlu0 %v965
  %v967 = vpop.xlane.xlu0 %966
  %v968 = vadd.f32 %v949, %v950
  %969 = vadd.xlane.f32.xlu0 %v968
  %v970 = vpop.xlane.xlu0 %969
  %v971 = vadd.f32 %v951, %v952
  %972 = vadd.xlane.f32.xlu0 %v971
  %v973 = vpop.xlane.xlu0 %972
  %v974 = vadd.f32 %v953, %v954
  %975 = vadd.xlane.f32.xlu0 %v974
  %v976 = vpop.xlane.xlu0 %975
  %v977 = vadd.f32 %v955, %v956
  %978 = vadd.xlane.f32.xlu0 %v977
  %v979 = vpop.xlane.xlu0 %978
  %v980 = vadd.f32 %v957, %v958
  %981 = vadd.xlane.f32.xlu0 %v980
  %v982 = vpop.xlane.xlu0 %981
  %v983 = vld [vmem:[#allocation2] sm:$0x1]
  %v985 = vperm.slane %v983, 0
  %v987 = vadd.f32 %v961, %v985
  %v988 = vadd.f32 %v964, %v985
  %v989 = vadd.f32 %v967, %v985
  %v990 = vadd.f32 %v970, %v985
  %v991 = vadd.f32 %v973, %v985
  %v992 = vadd.f32 %v976, %v985
  %v993 = vadd.f32 %v979, %v985
  %v994 = vadd.f32 %v982, %v985
  %vm995 = vcmask 7168
  %996 = vst.msk [vmem:[%s8] sm:$0xff] %vm995, %v987
  %997 = vst.msk [vmem:[%s8 + $0x8] sm:$0xff] %vm995, %v988
  %998 = vst.msk [vmem:[%s8 + $0x10] sm:$0xff] %vm995, %v989
  %999 = vst.msk [vmem:[%s8 + $0x18] sm:$0xff] %vm995, %v990
  %1000 = vst.msk [vmem:[%s8 + $0x20] sm:$0xff] %vm995, %v991
  %1001 = vst.msk [vmem:[%s8 + $0x28] sm:$0xff] %vm995, %v992
  %1002 = vst.msk [vmem:[%s8 + $0x30] sm:$0xff] %vm995, %v993
  %1003 = vst.msk [vmem:[%s8 + $0x38] sm:$0xff] %vm995, %v994
  // Predicated region
  $region34: #{critic_forward.1} parent=0 // pred_check
    _
  $region35: #{critic_forward.1} parent=0 // pred_check_branch
    %1005 = sbr.rel (0) target = $region37
  $region36: #{critic_forward.1} parent=0 // pred_region
    _
  $region37: #{critic_forward.1} parent=0 // pred_fallthru
    _
  // Predicated region
  $region38: #{critic_forward.1} parent=0 // pred_check
    _
  $region39: #{critic_forward.1} parent=0 // pred_check_branch
    %1007 = sbr.rel (0) target = $region41
  $region40: #{critic_forward.1} parent=0 // pred_region
    _
  $region41: #{critic_forward.1} parent=0 // pred_fallthru
    _

</llo_original>
